<compile_context>
chip_gen: v6e
topology: v6e:2x2x1
jax: 0.10.0
libtpu: 0.0.40
codegen_flags: <defaults>
</compile_context>

<pallas_src>
import jax
import jax.numpy as jnp
from jax.experimental import pallas as pl
from jax.experimental.pallas import tpu as pltpu


def _edgeconv_kernel(xi_ref, xj_ref, wd_ref, w2_ref, b_ref, out_ref):
    """One (Cout-tile, M-tile) output block of the EdgeConv forward.

    xi_ref:  (C, TM)      center features (k-invariant -> hoisted out of the K-max)
    xj_ref:  (K, C, TM)   gathered neighbor features
    wd_ref:  (TCout, C)   W1 - W2  (multiplies x_i)
    w2_ref:  (TCout, C)   W2       (multiplies x_j)
    b_ref:   (TCout, 1)   bias (f32)
    out_ref: (TCout, TM)
    """
    k_total = xj_ref.shape[0]
    w2 = w2_ref[...]

    # k-invariant center contribution: computed once, not per neighbor.
    base = jnp.dot(wd_ref[...], xi_ref[...], preferred_element_type=jnp.float32)

    # Running max over neighbors of W2 @ x_j (K small & static -> unrolled).
    acc = jnp.dot(w2, xj_ref[0], preferred_element_type=jnp.float32)
    for k in range(1, k_total):
        acc = jnp.maximum(acc, jnp.dot(w2, xj_ref[k],
                                       preferred_element_type=jnp.float32))

    # bias + ReLU hoisted out of the K-max (bias is k-invariant, relu monotone).
    out_ref[...] = jnp.maximum(base + acc + b_ref[...], 0.0).astype(out_ref.dtype)


def _round_up(v, m):
    return (v + m - 1) // m * m


def _round_down(v, m):
    return max(m, v // m * m)


_TARGET_STEP_BYTES = 2 << 20       # aim for >= ~2 MB of input per grid step
_INPUT_VMEM_BUDGET = 36 << 20      # double-buffered input blocks (fits v7x's 64 MiB VMEM)
_ACC_VREG_BUDGET = 128 << 10       # live f32 accumulator <= ~half the vreg file


def _auto_tile_m(M, K, C, tile_cout, feat_bytes):
    """Pick the M (lane) tile from per-step bytes, VMEM and vreg budgets."""
    m128 = _round_up(M, 128)
    per_col = (K + 1) * C * feat_bytes + tile_cout * 4     # xi + xj + out bytes / lane col
    tile = _round_up(max(_TARGET_STEP_BYTES // per_col, 1), 128)
    # VMEM cap: 2x (double-buffered) blocks must stay inside the budget.
    tile = min(tile, _round_down(_INPUT_VMEM_BUDGET // (2 * per_col), 128))
    # vreg cap: live f32 accumulator is (tile_cout, tile).
    tile = min(tile, _round_down(_ACC_VREG_BUDGET // (tile_cout * 4), 128))
    # Keep >= 2 grid steps along M when possible (v7x has 2 TensorCores).
    if m128 >= 256:
        tile = min(tile, _round_down(m128 // 2, 128))
    return max(128, min(tile, m128))


def batched_index_select(x, idx):
    """x: [B, C, N, 1], idx: [B, N, K] (values in [0, N)) -> [B, C, N, K]."""
    xf = x[..., 0]  # [B, C, N]
    return jax.vmap(lambda xb, ib: xb[:, ib])(xf, idx)


def edge_conv2d(x, edge_index, weight, bias, *, tile_m=None,
                feature_dtype=jnp.bfloat16):
    """Pallas-backed EdgeConv2d forward (gcn_lib dense variant).

    x:          [B, C, N, 1] float32
    edge_index: [2, B, N, K] int32.  edge_index[1] is the center-vertex index and
                is assumed k-invariant (true for gcn_lib dense graphs where it is
                the broadcast arange(N)); edge_index[0] holds the KNN neighbors.
    weight:     [Cout, 2C, 1, 1]  (Conv2d 1x1 weight applied to cat([x_i, x_j - x_i]))
    bias:       [Cout]
    returns     [B, Cout, N, 1] float32
    """
    B, C, N, _ = x.shape
    K = edge_index.shape[-1]
    cout = weight.shape[0]
    M = B * N
    feat_bytes = jnp.dtype(feature_dtype).itemsize

    # ---- Cout tiling (bounds accumulator vreg pressure for large Cout) ----
    tile_cout = min(_round_up(cout, 8), 128)
    cout_pad = _round_up(cout, tile_cout)

    # ---- M tiling: lane-dense, sized from per-step bytes / VMEM / vreg budgets ----
    if tile_m is None:
        tile = _auto_tile_m(M, K, C, tile_cout, feat_bytes)
    else:
        tile = _round_up(min(tile_m, _round_up(M, 128)), 128)
    m_pad = _round_up(M, tile)
    pad = m_pad - M

    # ---- glue: flatten vertices, gather neighbor features (bf16 stream) ----
    # TODO(synk): in-kernel gather via scalar-prefetched edge_index + manual DMA.
    x_cm = jnp.transpose(x[..., 0], (1, 0, 2)).reshape(C, M).astype(feature_dtype)
    offs = (jnp.arange(B, dtype=edge_index.dtype) * N)[:, None, None]      # [B,1,1]
    # Center index: k-invariant (gcn_lib dense graph) -> take the k=0 slice only.
    idx_i = (edge_index[1, :, :, 0] + offs[:, :, 0]).reshape(M)            # [M]
    idx_j = jnp.transpose(edge_index[0] + offs, (2, 0, 1)).reshape(K, M)   # [K, M]
    if pad:
        # pad with index 0 (valid); padded columns are sliced off afterwards
        idx_i = jnp.pad(idx_i, ((0, pad),))
        idx_j = jnp.pad(idx_j, ((0, 0), (0, pad)))
    xi = jnp.take(x_cm, idx_i, axis=1)                                     # [C, Mp]
    xj = jax.vmap(lambda row: jnp.take(x_cm, row, axis=1))(idx_j)          # [K, C, Mp]

    # ---- weight split: W @ cat(x_i, x_j - x_i) = (W1 - W2) @ x_i + W2 @ x_j ----
    w2d = weight.reshape(cout, 2 * C).astype(jnp.float32)
    w1, w2 = w2d[:, :C], w2d[:, C:]
    wd = (w1 - w2).astype(feature_dtype)      # difference computed in f32, stored bf16
    w2c = w2.astype(feature_dtype)
    b2 = bias.reshape(cout, 1).astype(jnp.float32)
    if cout_pad != cout:
        zpad = ((0, cout_pad - cout), (0, 0))
        wd = jnp.pad(wd, zpad)
        w2c = jnp.pad(w2c, zpad)
        b2 = jnp.pad(b2, zpad)

    grid = (m_pad // tile, cout_pad // tile_cout)

    # Explicit VMEM limit: raises v5e's 16 MiB default, stays under v7x's 64 MiB.
    step_bytes = ((K + 1) * C * tile + 2 * tile_cout * C) * feat_bytes \
        + tile_cout * 4 + tile_cout * tile * 4
    vmem_limit = int(min(max(2 * step_bytes + (8 << 20), 32 << 20), 56 << 20))

    flops = 2 * C * cout_pad * (K + 1) * m_pad
    bytes_accessed = int(feat_bytes * ((K + 1) * C * m_pad + 2 * cout_pad * C)
                         + 4 * cout_pad * (m_pad + 1))

    out_flat = pl.pallas_call(
        _edgeconv_kernel,
        out_shape=jax.ShapeDtypeStruct((cout_pad, m_pad), jnp.float32),
        grid_spec=pltpu.PrefetchScalarGridSpec(
            num_scalar_prefetch=0,
            grid=grid,
            in_specs=[
                pl.BlockSpec((C, tile), lambda i, co: (0, i)),
                pl.BlockSpec((K, C, tile), lambda i, co: (0, 0, i)),
                pl.BlockSpec((tile_cout, C), lambda i, co: (co, 0)),
                pl.BlockSpec((tile_cout, C), lambda i, co: (co, 0)),
                pl.BlockSpec((tile_cout, 1), lambda i, co: (co, 0)),
            ],
            out_specs=pl.BlockSpec((tile_cout, tile), lambda i, co: (co, i)),
        ),
        compiler_params=pltpu.CompilerParams(
            dimension_semantics=("parallel", "arbitrary"),
            vmem_limit_bytes=vmem_limit),
        cost_estimate=pl.CostEstimate(
            flops=flops, transcendentals=0, bytes_accessed=bytes_accessed),
    )(xi, xj, wd, w2c, b2)

    # [Cout_pad, Mp] -> [B, Cout, N, 1]  (matches torch keepdim=True on last axis)
    out = out_flat[:cout, :M].reshape(cout, B, N)
    return jnp.transpose(out, (1, 0, 2))[..., None].astype(x.dtype)


def edge_conv2d_reference(x, edge_index, weight, bias):
    """Plain-JAX reference mirroring the PyTorch forward exactly (f32)."""
    x_i = batched_index_select(x, edge_index[1])
    x_j = batched_index_select(x, edge_index[0])
    feat = jnp.concatenate([x_i, x_j - x_i], axis=1)              # [B, 2C, N, K]
    w = weight[:, :, 0, 0]                                         # [Cout, 2C]
    y = jnp.einsum('oc,bcnk->bonk', w, feat) + bias[None, :, None, None]
    y = jnp.maximum(y, 0.0)                                        # ReLU (act='relu', norm=None)
    return jnp.max(y, axis=-1, keepdims=True)                      # [B, Cout, N, 1]


if __name__ == "__main__":
    key = jax.random.PRNGKey(0)
    B, C, N, K = 2, 4, 16, 8
    Cout = 8
    k1, k2, k3, k4 = jax.random.split(key, 4)

    x = jax.random.normal(k1, (B, C, N, 1), dtype=jnp.float32)
    # gcn_lib dense-graph edge_index: [0] = KNN neighbor idx, [1] = broadcast center idx.
    nbr_idx = jax.random.randint(k2, (B, N, K), 0, N, dtype=jnp.int32)
    center_idx = jnp.broadcast_to(
        jnp.arange(N, dtype=jnp.int32)[None, :, None], (B, N, K))
    edge_index = jnp.stack([nbr_idx, center_idx], axis=0)          # [2, B, N, K]

    # deterministic synthetic Conv2d(2C, Cout, 1, bias=True) parameters
    weight = jax.random.normal(k3, (Cout, 2 * C, 1, 1), dtype=jnp.float32) / jnp.sqrt(2.0 * C)
    bias = 0.1 * jax.random.normal(k4, (Cout,), dtype=jnp.float32)

    out = edge_conv2d(x, edge_index, weight, bias)
    out = jax.block_until_ready(out)

    ref = edge_conv2d_reference(x, edge_index, weight, bias)
    assert out.shape == (B, Cout, N, 1), out.shape
    # bf16 feature / weight streams inside the kernel -> relaxed tolerance vs f32 ref.
    err = float(jnp.max(jnp.abs(out - ref)))
    assert jnp.allclose(out, ref, atol=5e-2, rtol=5e-2), f"mismatch vs reference, max abs err {err}"

    print("KERNEL_OK")
</pallas_src>

<mosaic_0001>
module attributes {stable_mosaic.version = 11 : i64} {
  func.func @_edgeconv_kernel(%arg0: i32, %arg1: i32, %arg2: memref<4x128xbf16, #tpu.memory_space<vmem>>, %arg3: memref<8x4x128xbf16, #tpu.memory_space<vmem>>, %arg4: memref<8x4xbf16, #tpu.memory_space<vmem>>, %arg5: memref<8x4xbf16, #tpu.memory_space<vmem>>, %arg6: memref<8x1xf32, #tpu.memory_space<vmem>>, %arg7: memref<8x128xf32, #tpu.memory_space<vmem>>) attributes {dimension_semantics = [#tpu.dimension_semantics<parallel>, #tpu.dimension_semantics<arbitrary>], iteration_bounds = array<i64: 1, 1>, scalar_prefetch = 0 : i64, scratch_operands = 0 : i64, tpu.core_type = #tpu.core_type<tc>, window_params = [{transform_indices = @transform_0, window_bounds = array<i64: 4, 128>}, {transform_indices = @transform_1, window_bounds = array<i64: 8, 4, 128>}, {transform_indices = @transform_2, window_bounds = array<i64: 8, 4>}, {transform_indices = @transform_3, window_bounds = array<i64: 8, 4>}, {transform_indices = @transform_4, window_bounds = array<i64: 8, 1>}, {transform_indices = @transform_5, window_bounds = array<i64: 8, 128>}]} {
    %c0 = arith.constant 0 : index
    %c0_0 = arith.constant 0 : index
    %0 = vector.load %arg5[%c0, %c0_0] : memref<8x4xbf16, #tpu.memory_space<vmem>>, vector<8x4xbf16>
    %c0_1 = arith.constant 0 : index
    %c0_2 = arith.constant 0 : index
    %1 = vector.load %arg4[%c0_1, %c0_2] : memref<8x4xbf16, #tpu.memory_space<vmem>>, vector<8x4xbf16>
    %c0_3 = arith.constant 0 : index
    %c0_4 = arith.constant 0 : index
    %2 = vector.load %arg2[%c0_3, %c0_4] : memref<4x128xbf16, #tpu.memory_space<vmem>>, vector<4x128xbf16>
    %cst = arith.constant dense<0.000000e+00> : vector<8x128xf32>
    %3 = tpu.matmul %1, %2, %cst {dimension_numbers = #tpu.dot_dimension_numbers<[1], [0], [0], [1], [0, 0, 1, 1], [], []>} : vector<8x4xbf16>, vector<4x128xbf16>, vector<8x128xf32> -> vector<8x128xf32>
    %c0_5 = arith.constant 0 : index
    %c0_6 = arith.constant 0 : index
    %c0_7 = arith.constant 0 : index
    %4 = vector.load %arg3[%c0_5, %c0_6, %c0_7] : memref<8x4x128xbf16, #tpu.memory_space<vmem>>, vector<1x4x128xbf16>
    %5 = vector.shape_cast %4 : vector<1x4x128xbf16> to vector<4x128xbf16>
    %cst_8 = arith.constant dense<0.000000e+00> : vector<8x128xf32>
    %6 = tpu.matmul %0, %5, %cst_8 {dimension_numbers = #tpu.dot_dimension_numbers<[1], [0], [0], [1], [0, 0, 1, 1], [], []>} : vector<8x4xbf16>, vector<4x128xbf16>, vector<8x128xf32> -> vector<8x128xf32>
    %c1 = arith.constant 1 : index
    %c0_9 = arith.constant 0 : index
    %c0_10 = arith.constant 0 : index
    %7 = vector.load %arg3[%c1, %c0_9, %c0_10] : memref<8x4x128xbf16, #tpu.memory_space<vmem>>, vector<1x4x128xbf16>
    %8 = vector.shape_cast %7 : vector<1x4x128xbf16> to vector<4x128xbf16>
    %cst_11 = arith.constant dense<0.000000e+00> : vector<8x128xf32>
    %9 = tpu.matmul %0, %8, %cst_11 {dimension_numbers = #tpu.dot_dimension_numbers<[1], [0], [0], [1], [0, 0, 1, 1], [], []>} : vector<8x4xbf16>, vector<4x128xbf16>, vector<8x128xf32> -> vector<8x128xf32>
    %10 = arith.maximumf %6, %9 : vector<8x128xf32>
    %c2 = arith.constant 2 : index
    %c0_12 = arith.constant 0 : index
    %c0_13 = arith.constant 0 : index
    %11 = vector.load %arg3[%c2, %c0_12, %c0_13] : memref<8x4x128xbf16, #tpu.memory_space<vmem>>, vector<1x4x128xbf16>
    %12 = vector.shape_cast %11 : vector<1x4x128xbf16> to vector<4x128xbf16>
    %cst_14 = arith.constant dense<0.000000e+00> : vector<8x128xf32>
    %13 = tpu.matmul %0, %12, %cst_14 {dimension_numbers = #tpu.dot_dimension_numbers<[1], [0], [0], [1], [0, 0, 1, 1], [], []>} : vector<8x4xbf16>, vector<4x128xbf16>, vector<8x128xf32> -> vector<8x128xf32>
    %14 = arith.maximumf %10, %13 : vector<8x128xf32>
    %c3 = arith.constant 3 : index
    %c0_15 = arith.constant 0 : index
    %c0_16 = arith.constant 0 : index
    %15 = vector.load %arg3[%c3, %c0_15, %c0_16] : memref<8x4x128xbf16, #tpu.memory_space<vmem>>, vector<1x4x128xbf16>
    %16 = vector.shape_cast %15 : vector<1x4x128xbf16> to vector<4x128xbf16>
    %cst_17 = arith.constant dense<0.000000e+00> : vector<8x128xf32>
    %17 = tpu.matmul %0, %16, %cst_17 {dimension_numbers = #tpu.dot_dimension_numbers<[1], [0], [0], [1], [0, 0, 1, 1], [], []>} : vector<8x4xbf16>, vector<4x128xbf16>, vector<8x128xf32> -> vector<8x128xf32>
    %18 = arith.maximumf %14, %17 : vector<8x128xf32>
    %c4 = arith.constant 4 : index
    %c0_18 = arith.constant 0 : index
    %c0_19 = arith.constant 0 : index
    %19 = vector.load %arg3[%c4, %c0_18, %c0_19] : memref<8x4x128xbf16, #tpu.memory_space<vmem>>, vector<1x4x128xbf16>
    %20 = vector.shape_cast %19 : vector<1x4x128xbf16> to vector<4x128xbf16>
    %cst_20 = arith.constant dense<0.000000e+00> : vector<8x128xf32>
    %21 = tpu.matmul %0, %20, %cst_20 {dimension_numbers = #tpu.dot_dimension_numbers<[1], [0], [0], [1], [0, 0, 1, 1], [], []>} : vector<8x4xbf16>, vector<4x128xbf16>, vector<8x128xf32> -> vector<8x128xf32>
    %22 = arith.maximumf %18, %21 : vector<8x128xf32>
    %c5 = arith.constant 5 : index
    %c0_21 = arith.constant 0 : index
    %c0_22 = arith.constant 0 : index
    %23 = vector.load %arg3[%c5, %c0_21, %c0_22] : memref<8x4x128xbf16, #tpu.memory_space<vmem>>, vector<1x4x128xbf16>
    %24 = vector.shape_cast %23 : vector<1x4x128xbf16> to vector<4x128xbf16>
    %cst_23 = arith.constant dense<0.000000e+00> : vector<8x128xf32>
    %25 = tpu.matmul %0, %24, %cst_23 {dimension_numbers = #tpu.dot_dimension_numbers<[1], [0], [0], [1], [0, 0, 1, 1], [], []>} : vector<8x4xbf16>, vector<4x128xbf16>, vector<8x128xf32> -> vector<8x128xf32>
    %26 = arith.maximumf %22, %25 : vector<8x128xf32>
    %c6 = arith.constant 6 : index
    %c0_24 = arith.constant 0 : index
    %c0_25 = arith.constant 0 : index
    %27 = vector.load %arg3[%c6, %c0_24, %c0_25] : memref<8x4x128xbf16, #tpu.memory_space<vmem>>, vector<1x4x128xbf16>
    %28 = vector.shape_cast %27 : vector<1x4x128xbf16> to vector<4x128xbf16>
    %cst_26 = arith.constant dense<0.000000e+00> : vector<8x128xf32>
    %29 = tpu.matmul %0, %28, %cst_26 {dimension_numbers = #tpu.dot_dimension_numbers<[1], [0], [0], [1], [0, 0, 1, 1], [], []>} : vector<8x4xbf16>, vector<4x128xbf16>, vector<8x128xf32> -> vector<8x128xf32>
    %30 = arith.maximumf %26, %29 : vector<8x128xf32>
    %c7 = arith.constant 7 : index
    %c0_27 = arith.constant 0 : index
    %c0_28 = arith.constant 0 : index
    %31 = vector.load %arg3[%c7, %c0_27, %c0_28] : memref<8x4x128xbf16, #tpu.memory_space<vmem>>, vector<1x4x128xbf16>
    %32 = vector.shape_cast %31 : vector<1x4x128xbf16> to vector<4x128xbf16>
    %cst_29 = arith.constant dense<0.000000e+00> : vector<8x128xf32>
    %33 = tpu.matmul %0, %32, %cst_29 {dimension_numbers = #tpu.dot_dimension_numbers<[1], [0], [0], [1], [0, 0, 1, 1], [], []>} : vector<8x4xbf16>, vector<4x128xbf16>, vector<8x128xf32> -> vector<8x128xf32>
    %34 = arith.maximumf %30, %33 : vector<8x128xf32>
    %35 = arith.addf %3, %34 : vector<8x128xf32>
    %c0_30 = arith.constant 0 : index
    %c0_31 = arith.constant 0 : index
    %36 = vector.load %arg6[%c0_30, %c0_31] : memref<8x1xf32, #tpu.memory_space<vmem>>, vector<8x1xf32>
    %37 = vector.broadcast %36 : vector<8x1xf32> to vector<8x128xf32>
    %38 = arith.addf %35, %37 : vector<8x128xf32>
    %cst_32 = arith.constant 0.000000e+00 : f32
    %39 = vector.broadcast %cst_32 : f32 to vector<8x128xf32>
    %40 = arith.maximumf %38, %39 : vector<8x128xf32>
    %c0_33 = arith.constant 0 : index
    %c0_34 = arith.constant 0 : index
    %41 = vector.load %arg7[%c0_33, %c0_34] : memref<8x128xf32, #tpu.memory_space<vmem>>, vector<8x128xf32>
    tpu.vector_store %arg7[%c0_33, %c0_34], %40 {strides = array<i32>} : memref<8x128xf32, #tpu.memory_space<vmem>>, vector<8x128xf32>,
    return
  }
  func.func @transform_0(%arg0: i32, %arg1: i32) -> (i32, i32) {
    %c0_i32 = arith.constant 0 : i32
    %c0_i32_0 = arith.constant 0 : i32
    return %c0_i32, %arg0 : i32, i32
  }
  func.func @transform_1(%arg0: i32, %arg1: i32) -> (i32, i32, i32) {
    %c0_i32 = arith.constant 0 : i32
    %c0_i32_0 = arith.constant 0 : i32
    %c0_i32_1 = arith.constant 0 : i32
    return %c0_i32, %c0_i32_0, %arg0 : i32, i32, i32
  }
  func.func @transform_2(%arg0: i32, %arg1: i32) -> (i32, i32) {
    %c0_i32 = arith.constant 0 : i32
    %c0_i32_0 = arith.constant 0 : i32
    return %arg1, %c0_i32 : i32, i32
  }
  func.func @transform_3(%arg0: i32, %arg1: i32) -> (i32, i32) {
    %c0_i32 = arith.constant 0 : i32
    %c0_i32_0 = arith.constant 0 : i32
    return %arg1, %c0_i32 : i32, i32
  }
  func.func @transform_4(%arg0: i32, %arg1: i32) -> (i32, i32) {
    %c0_i32 = arith.constant 0 : i32
    %c0_i32_0 = arith.constant 0 : i32
    return %arg1, %c0_i32 : i32, i32
  }
  func.func @transform_5(%arg0: i32, %arg1: i32) -> (i32, i32) {
    %c0_i32 = arith.constant 0 : i32
    return %arg1, %arg0 : i32, i32
  }
}

</mosaic_0001>

<llo_original>
// kernel: tpu_custom_call.1
$region0: #{tpu_custom_call.1}
  #allocation0 [shape = 'u32[]', space=smem, size = 0x4, offset = 0x4, fixed_abs, tag = 'smem constant byte address 0x4 - core index']
  #allocation1 [shape = 'u32[144,128]{1,0:T(1,128)}', space=vmem, size = 0x12000, scoped, tag = 'internal scratch']
  %s0 = inlined_call_operand.vmem [shape: bf16[4,128], index: 0, kind: input, shape index: {}]
  %s1 = inlined_call_operand.vmem [shape: bf16[8,4,128], index: 1, kind: input, shape index: {}]
  %s2 = inlined_call_operand.vmem [shape: bf16[8,4], index: 2, kind: input, shape index: {}]
  %s3 = inlined_call_operand.vmem [shape: bf16[8,4], index: 3, kind: input, shape index: {}]
  %s4 = inlined_call_operand.vmem [shape: f32[8,1], index: 4, kind: input, shape index: {}]
  %s5 = inlined_call_operand.hbm [shape: f32[8,128], index: 5, kind: output, shape index: {}]
  %s6 = sld [smem:[#allocation0]]
  $region30: #{tpu_custom_call.1} parent=0
    _
  %s8 = ssub.s32 1, %s6
  %s9 = scalar_select 0, %s8, %s6
  $region1: #{tpu_custom_call.1} parent=0
    #allocation2 [shape = 'u8[4096]{0}', space=vmem, size = 0x1000, scoped, tag = 'output window, operand 0, single buffered']
    #allocation3 [shape = 's32[1]{0}', space=sflag, size = 0x4, scoped, tag = 'scoped memory for tpu_custom_call.1']
    %10 = vsyncpa [#allocation3], 0
    // Predicated region
    $region2: #{tpu_custom_call.1} parent=1 // pred_check
      _
    $region3: #{tpu_custom_call.1} parent=1 // pred_check_branch
      %12 = sbr.rel (0) target = $region5
    $region4: #{tpu_custom_call.1} parent=1 // pred_region
      _
    $region5: #{tpu_custom_call.1} parent=1 // pred_fallthru
      _
    // Predicated region
    $region6: #{tpu_custom_call.1} parent=1 // pred_check
      _
    $region7: #{tpu_custom_call.1} parent=1 // pred_check_branch
      %14 = sbr.rel (0) target = $region9
    $region8: #{tpu_custom_call.1} parent=1 // pred_region
      _
    $region9: #{tpu_custom_call.1} parent=1 // pred_fallthru
      _
    // Predicated region
    $region10: #{tpu_custom_call.1} parent=1 // pred_check
      _
    $region11: #{tpu_custom_call.1} parent=1 // pred_check_branch
      %16 = sbr.rel (0) target = $region13
    $region12: #{tpu_custom_call.1} parent=1 // pred_region
      _
    $region13: #{tpu_custom_call.1} parent=1 // pred_fallthru
      _
    // Predicated region
    $region14: #{tpu_custom_call.1} parent=1 // pred_check
      _
    $region15: #{tpu_custom_call.1} parent=1 // pred_check_branch
      %18 = sbr.rel (0) target = $region17
    $region16: #{tpu_custom_call.1} parent=1 // pred_region
      _
    $region17: #{tpu_custom_call.1} parent=1 // pred_fallthru
      _
    // Predicated region
    $region18: #{tpu_custom_call.1} parent=1 // pred_check
      _
    $region19: #{tpu_custom_call.1} parent=1 // pred_check_branch
      %20 = sbr.rel (0) target = $region21
    $region20: #{tpu_custom_call.1} parent=1 // pred_region
      _
    $region21: #{tpu_custom_call.1} parent=1 // pred_fallthru
      _
    %v22 = vld [vmem:[%s3] sm:$0xf]
    %v23 = vld [vmem:[%s2] sm:$0xf]
    %v24 = vld [vmem:[%s0] sm:$0x3]
    %v25 = vld [vmem:[%s1] sm:$0x3]
    %vm26 = vcmask 31744
    %v28 = vsel %vm26, %v22, 0
    %vm30 = vcmask 1041408
    %v32 = vsel %vm30, %v25, 0
    %34 = vmatprep.subr.bf16.mxu0 0
    %35 = vmatpush1.bf16.msra.mxu0 0
    %36 = vmatprep.subr.bf16.mxu0 0
    %37 = vmatpush1.bf16.msra.mxu0 0
    %38 = vmatprep.subr.bf16.mxu0 0
    %39 = vmatpush1.bf16.msra.mxu0 0
    %40 = vmatprep.subr.bf16.mxu0 0
    %41 = vmatpush1.bf16.msra.mxu0 0
    %42 = vmatprep.subr.bf16.mxu0 0
    %43 = vmatpush1.bf16.msra.mxu0 0
    %44 = vmatprep.subr.bf16.mxu0 0
    %45 = vmatpush1.bf16.msra.mxu0 0
    %46 = vmatprep.subr.bf16.mxu0 0
    %47 = vmatpush1.bf16.msra.mxu0 0
    %48 = vmatprep.subr.bf16.mxu0 0
    %49 = vmatpush1.bf16.msra.mxu0 %v32
    %50 = vmatprep.subr.bf16.mxu0 0
    %51 = vmatpush2.bf16.msra.mxu0 0
    %52 = vmatprep.subr.bf16.mxu0 0
    %53 = vmatpush2.bf16.msra.mxu0 0
    %54 = vmatprep.subr.bf16.mxu0 0
    %55 = vmatpush2.bf16.msra.mxu0 0
    %56 = vmatprep.subr.bf16.mxu0 0
    %57 = vmatpush2.bf16.msra.mxu0 0
    %58 = vmatprep.subr.bf16.mxu0 0
    %59 = vmatpush2.bf16.msra.mxu0 0
    %60 = vmatprep.subr.bf16.mxu0 0
    %61 = vmatpush2.bf16.msra.mxu0 0
    %62 = vmatprep.subr.bf16.mxu0 0
    %63 = vmatpush2.bf16.msra.mxu0 0
    %64 = vmatprep.subr.bf16.mxu0 0
    %65 = vmatpush2.bf16.msra.mxu0 0
    %66 = vmatprep.mubr.bf16.mxu0 0
    %67 = vmatmul.mubr.bf16.gmra.mxu0 %v28
    %v68 = vpop.f32.mrf.mxu0
    %v69 = vadd.f32 0.0, %v68
    %v70 = vpop.f32.mrf.mxu0
    %v71 = vpop.f32.mrf.mxu0
    %v72 = vpop.f32.mrf.mxu0
    %73 = vdwg.mxu0
    %s74 = scalar_lea.vmem %s1, 2
    %v75 = vld [vmem:[%s74] sm:$0x3]
    %v77 = vsel %vm30, %v75, 0
    %79 = vmatprep.subr.bf16.mxu0 0
    %80 = vmatpush1.bf16.msra.mxu0 0
    %81 = vmatprep.subr.bf16.mxu0 0
    %82 = vmatpush1.bf16.msra.mxu0 0
    %83 = vmatprep.subr.bf16.mxu0 0
    %84 = vmatpush1.bf16.msra.mxu0 0
    %85 = vmatprep.subr.bf16.mxu0 0
    %86 = vmatpush1.bf16.msra.mxu0 0
    %87 = vmatprep.subr.bf16.mxu0 0
    %88 = vmatpush1.bf16.msra.mxu0 0
    %89 = vmatprep.subr.bf16.mxu0 0
    %90 = vmatpush1.bf16.msra.mxu0 0
    %91 = vmatprep.subr.bf16.mxu0 0
    %92 = vmatpush1.bf16.msra.mxu0 0
    %93 = vmatprep.subr.bf16.mxu0 0
    %94 = vmatpush1.bf16.msra.mxu0 %v77
    %95 = vmatprep.subr.bf16.mxu0 0
    %96 = vmatpush2.bf16.msra.mxu0 0
    %97 = vmatprep.subr.bf16.mxu0 0
    %98 = vmatpush2.bf16.msra.mxu0 0
    %99 = vmatprep.subr.bf16.mxu0 0
    %100 = vmatpush2.bf16.msra.mxu0 0
    %101 = vmatprep.subr.bf16.mxu0 0
    %102 = vmatpush2.bf16.msra.mxu0 0
    %103 = vmatprep.subr.bf16.mxu0 0
    %104 = vmatpush2.bf16.msra.mxu0 0
    %105 = vmatprep.subr.bf16.mxu0 0
    %106 = vmatpush2.bf16.msra.mxu0 0
    %107 = vmatprep.subr.bf16.mxu0 0
    %108 = vmatpush2.bf16.msra.mxu0 0
    %109 = vmatprep.subr.bf16.mxu0 0
    %110 = vmatpush2.bf16.msra.mxu0 0
    %111 = vmatprep.mubr.bf16.mxu0 0
    %112 = vmatmul.mubr.bf16.gmra.mxu0 %v28
    %v113 = vpop.f32.mrf.mxu0
    %v114 = vadd.f32 0.0, %v113
    %v115 = vpop.f32.mrf.mxu0
    %v116 = vpop.f32.mrf.mxu0
    %v117 = vpop.f32.mrf.mxu0
    %118 = vdwg.mxu0
    %v119 = vmax.f32 %v69, %v114
    %s120 = scalar_lea.vmem %s1, 4
    %v121 = vld [vmem:[%s120] sm:$0x3]
    %v123 = vsel %vm30, %v121, 0
    %125 = vmatprep.subr.bf16.mxu0 0
    %126 = vmatpush1.bf16.msra.mxu0 0
    %127 = vmatprep.subr.bf16.mxu0 0
    %128 = vmatpush1.bf16.msra.mxu0 0
    %129 = vmatprep.subr.bf16.mxu0 0
    %130 = vmatpush1.bf16.msra.mxu0 0
    %131 = vmatprep.subr.bf16.mxu0 0
    %132 = vmatpush1.bf16.msra.mxu0 0
    %133 = vmatprep.subr.bf16.mxu0 0
    %134 = vmatpush1.bf16.msra.mxu0 0
    %135 = vmatprep.subr.bf16.mxu0 0
    %136 = vmatpush1.bf16.msra.mxu0 0
    %137 = vmatprep.subr.bf16.mxu0 0
    %138 = vmatpush1.bf16.msra.mxu0 0
    %139 = vmatprep.subr.bf16.mxu0 0
    %140 = vmatpush1.bf16.msra.mxu0 %v123
    %141 = vmatprep.subr.bf16.mxu0 0
    %142 = vmatpush2.bf16.msra.mxu0 0
    %143 = vmatprep.subr.bf16.mxu0 0
    %144 = vmatpush2.bf16.msra.mxu0 0
    %145 = vmatprep.subr.bf16.mxu0 0
    %146 = vmatpush2.bf16.msra.mxu0 0
    %147 = vmatprep.subr.bf16.mxu0 0
    %148 = vmatpush2.bf16.msra.mxu0 0
    %149 = vmatprep.subr.bf16.mxu0 0
    %150 = vmatpush2.bf16.msra.mxu0 0
    %151 = vmatprep.subr.bf16.mxu0 0
    %152 = vmatpush2.bf16.msra.mxu0 0
    %153 = vmatprep.subr.bf16.mxu0 0
    %154 = vmatpush2.bf16.msra.mxu0 0
    %155 = vmatprep.subr.bf16.mxu0 0
    %156 = vmatpush2.bf16.msra.mxu0 0
    %157 = vmatprep.mubr.bf16.mxu0 0
    %158 = vmatmul.mubr.bf16.gmra.mxu0 %v28
    %v159 = vpop.f32.mrf.mxu0
    %v160 = vadd.f32 0.0, %v159
    %v161 = vpop.f32.mrf.mxu0
    %v162 = vpop.f32.mrf.mxu0
    %v163 = vpop.f32.mrf.mxu0
    %164 = vdwg.mxu0
    %v165 = vmax.f32 %v119, %v160
    %s166 = scalar_lea.vmem %s1, 6
    %v167 = vld [vmem:[%s166] sm:$0x3]
    %v169 = vsel %vm30, %v167, 0
    %171 = vmatprep.subr.bf16.mxu0 0
    %172 = vmatpush1.bf16.msra.mxu0 0
    %173 = vmatprep.subr.bf16.mxu0 0
    %174 = vmatpush1.bf16.msra.mxu0 0
    %175 = vmatprep.subr.bf16.mxu0 0
    %176 = vmatpush1.bf16.msra.mxu0 0
    %177 = vmatprep.subr.bf16.mxu0 0
    %178 = vmatpush1.bf16.msra.mxu0 0
    %179 = vmatprep.subr.bf16.mxu0 0
    %180 = vmatpush1.bf16.msra.mxu0 0
    %181 = vmatprep.subr.bf16.mxu0 0
    %182 = vmatpush1.bf16.msra.mxu0 0
    %183 = vmatprep.subr.bf16.mxu0 0
    %184 = vmatpush1.bf16.msra.mxu0 0
    %185 = vmatprep.subr.bf16.mxu0 0
    %186 = vmatpush1.bf16.msra.mxu0 %v169
    %187 = vmatprep.subr.bf16.mxu0 0
    %188 = vmatpush2.bf16.msra.mxu0 0
    %189 = vmatprep.subr.bf16.mxu0 0
    %190 = vmatpush2.bf16.msra.mxu0 0
    %191 = vmatprep.subr.bf16.mxu0 0
    %192 = vmatpush2.bf16.msra.mxu0 0
    %193 = vmatprep.subr.bf16.mxu0 0
    %194 = vmatpush2.bf16.msra.mxu0 0
    %195 = vmatprep.subr.bf16.mxu0 0
    %196 = vmatpush2.bf16.msra.mxu0 0
    %197 = vmatprep.subr.bf16.mxu0 0
    %198 = vmatpush2.bf16.msra.mxu0 0
    %199 = vmatprep.subr.bf16.mxu0 0
    %200 = vmatpush2.bf16.msra.mxu0 0
    %201 = vmatprep.subr.bf16.mxu0 0
    %202 = vmatpush2.bf16.msra.mxu0 0
    %203 = vmatprep.mubr.bf16.mxu0 0
    %204 = vmatmul.mubr.bf16.gmra.mxu0 %v28
    %v205 = vpop.f32.mrf.mxu0
    %v206 = vadd.f32 0.0, %v205
    %v207 = vpop.f32.mrf.mxu0
    %v208 = vpop.f32.mrf.mxu0
    %v209 = vpop.f32.mrf.mxu0
    %210 = vdwg.mxu0
    %v211 = vmax.f32 %v165, %v206
    %s212 = scalar_lea.vmem %s1, 8
    %v213 = vld [vmem:[%s212] sm:$0x3]
    %v215 = vsel %vm30, %v213, 0
    %217 = vmatprep.subr.bf16.mxu0 0
    %218 = vmatpush1.bf16.msra.mxu0 0
    %219 = vmatprep.subr.bf16.mxu0 0
    %220 = vmatpush1.bf16.msra.mxu0 0
    %221 = vmatprep.subr.bf16.mxu0 0
    %222 = vmatpush1.bf16.msra.mxu0 0
    %223 = vmatprep.subr.bf16.mxu0 0
    %224 = vmatpush1.bf16.msra.mxu0 0
    %225 = vmatprep.subr.bf16.mxu0 0
    %226 = vmatpush1.bf16.msra.mxu0 0
    %227 = vmatprep.subr.bf16.mxu0 0
    %228 = vmatpush1.bf16.msra.mxu0 0
    %229 = vmatprep.subr.bf16.mxu0 0
    %230 = vmatpush1.bf16.msra.mxu0 0
    %231 = vmatprep.subr.bf16.mxu0 0
    %232 = vmatpush1.bf16.msra.mxu0 %v215
    %233 = vmatprep.subr.bf16.mxu0 0
    %234 = vmatpush2.bf16.msra.mxu0 0
    %235 = vmatprep.subr.bf16.mxu0 0
    %236 = vmatpush2.bf16.msra.mxu0 0
    %237 = vmatprep.subr.bf16.mxu0 0
    %238 = vmatpush2.bf16.msra.mxu0 0
    %239 = vmatprep.subr.bf16.mxu0 0
    %240 = vmatpush2.bf16.msra.mxu0 0
    %241 = vmatprep.subr.bf16.mxu0 0
    %242 = vmatpush2.bf16.msra.mxu0 0
    %243 = vmatprep.subr.bf16.mxu0 0
    %244 = vmatpush2.bf16.msra.mxu0 0
    %245 = vmatprep.subr.bf16.mxu0 0
    %246 = vmatpush2.bf16.msra.mxu0 0
    %247 = vmatprep.subr.bf16.mxu0 0
    %248 = vmatpush2.bf16.msra.mxu0 0
    %249 = vmatprep.mubr.bf16.mxu0 0
    %250 = vmatmul.mubr.bf16.gmra.mxu0 %v28
    %v251 = vpop.f32.mrf.mxu0
    %v252 = vadd.f32 0.0, %v251
    %v253 = vpop.f32.mrf.mxu0
    %v254 = vpop.f32.mrf.mxu0
    %v255 = vpop.f32.mrf.mxu0
    %256 = vdwg.mxu0
    %v257 = vmax.f32 %v211, %v252
    %s258 = scalar_lea.vmem %s1, 10
    %v259 = vld [vmem:[%s258] sm:$0x3]
    %v261 = vsel %vm30, %v259, 0
    %263 = vmatprep.subr.bf16.mxu0 0
    %264 = vmatpush1.bf16.msra.mxu0 0
    %265 = vmatprep.subr.bf16.mxu0 0
    %266 = vmatpush1.bf16.msra.mxu0 0
    %267 = vmatprep.subr.bf16.mxu0 0
    %268 = vmatpush1.bf16.msra.mxu0 0
    %269 = vmatprep.subr.bf16.mxu0 0
    %270 = vmatpush1.bf16.msra.mxu0 0
    %271 = vmatprep.subr.bf16.mxu0 0
    %272 = vmatpush1.bf16.msra.mxu0 0
    %273 = vmatprep.subr.bf16.mxu0 0
    %274 = vmatpush1.bf16.msra.mxu0 0
    %275 = vmatprep.subr.bf16.mxu0 0
    %276 = vmatpush1.bf16.msra.mxu0 0
    %277 = vmatprep.subr.bf16.mxu0 0
    %278 = vmatpush1.bf16.msra.mxu0 %v261
    %279 = vmatprep.subr.bf16.mxu0 0
    %280 = vmatpush2.bf16.msra.mxu0 0
    %281 = vmatprep.subr.bf16.mxu0 0
    %282 = vmatpush2.bf16.msra.mxu0 0
    %283 = vmatprep.subr.bf16.mxu0 0
    %284 = vmatpush2.bf16.msra.mxu0 0
    %285 = vmatprep.subr.bf16.mxu0 0
    %286 = vmatpush2.bf16.msra.mxu0 0
    %287 = vmatprep.subr.bf16.mxu0 0
    %288 = vmatpush2.bf16.msra.mxu0 0
    %289 = vmatprep.subr.bf16.mxu0 0
    %290 = vmatpush2.bf16.msra.mxu0 0
    %291 = vmatprep.subr.bf16.mxu0 0
    %292 = vmatpush2.bf16.msra.mxu0 0
    %293 = vmatprep.subr.bf16.mxu0 0
    %294 = vmatpush2.bf16.msra.mxu0 0
    %295 = vmatprep.mubr.bf16.mxu0 0
    %296 = vmatmul.mubr.bf16.gmra.mxu0 %v28
    %v297 = vpop.f32.mrf.mxu0
    %v298 = vadd.f32 0.0, %v297
    %v299 = vpop.f32.mrf.mxu0
    %v300 = vpop.f32.mrf.mxu0
    %v301 = vpop.f32.mrf.mxu0
    %302 = vdwg.mxu0
    %v303 = vmax.f32 %v257, %v298
    %s304 = scalar_lea.vmem %s1, 12
    %v305 = vld [vmem:[%s304] sm:$0x3]
    %v307 = vsel %vm30, %v305, 0
    %309 = vmatprep.subr.bf16.mxu0 0
    %310 = vmatpush1.bf16.msra.mxu0 0
    %311 = vmatprep.subr.bf16.mxu0 0
    %312 = vmatpush1.bf16.msra.mxu0 0
    %313 = vmatprep.subr.bf16.mxu0 0
    %314 = vmatpush1.bf16.msra.mxu0 0
    %315 = vmatprep.subr.bf16.mxu0 0
    %316 = vmatpush1.bf16.msra.mxu0 0
    %317 = vmatprep.subr.bf16.mxu0 0
    %318 = vmatpush1.bf16.msra.mxu0 0
    %319 = vmatprep.subr.bf16.mxu0 0
    %320 = vmatpush1.bf16.msra.mxu0 0
    %321 = vmatprep.subr.bf16.mxu0 0
    %322 = vmatpush1.bf16.msra.mxu0 0
    %323 = vmatprep.subr.bf16.mxu0 0
    %324 = vmatpush1.bf16.msra.mxu0 %v307
    %325 = vmatprep.subr.bf16.mxu0 0
    %326 = vmatpush2.bf16.msra.mxu0 0
    %327 = vmatprep.subr.bf16.mxu0 0
    %328 = vmatpush2.bf16.msra.mxu0 0
    %329 = vmatprep.subr.bf16.mxu0 0
    %330 = vmatpush2.bf16.msra.mxu0 0
    %331 = vmatprep.subr.bf16.mxu0 0
    %332 = vmatpush2.bf16.msra.mxu0 0
    %333 = vmatprep.subr.bf16.mxu0 0
    %334 = vmatpush2.bf16.msra.mxu0 0
    %335 = vmatprep.subr.bf16.mxu0 0
    %336 = vmatpush2.bf16.msra.mxu0 0
    %337 = vmatprep.subr.bf16.mxu0 0
    %338 = vmatpush2.bf16.msra.mxu0 0
    %339 = vmatprep.subr.bf16.mxu0 0
    %340 = vmatpush2.bf16.msra.mxu0 0
    %341 = vmatprep.mubr.bf16.mxu0 0
    %342 = vmatmul.mubr.bf16.gmra.mxu0 %v28
    %v343 = vpop.f32.mrf.mxu0
    %v344 = vadd.f32 0.0, %v343
    %v345 = vpop.f32.mrf.mxu0
    %v346 = vpop.f32.mrf.mxu0
    %v347 = vpop.f32.mrf.mxu0
    %348 = vdwg.mxu0
    %v349 = vmax.f32 %v303, %v344
    %s350 = scalar_lea.vmem %s1, 14
    %v351 = vld [vmem:[%s350] sm:$0x3]
    %v353 = vsel %vm30, %v351, 0
    %355 = vmatprep.subr.bf16.mxu0 0
    %356 = vmatpush1.bf16.msra.mxu0 0
    %357 = vmatprep.subr.bf16.mxu0 0
    %358 = vmatpush1.bf16.msra.mxu0 0
    %359 = vmatprep.subr.bf16.mxu0 0
    %360 = vmatpush1.bf16.msra.mxu0 0
    %361 = vmatprep.subr.bf16.mxu0 0
    %362 = vmatpush1.bf16.msra.mxu0 0
    %363 = vmatprep.subr.bf16.mxu0 0
    %364 = vmatpush1.bf16.msra.mxu0 0
    %365 = vmatprep.subr.bf16.mxu0 0
    %366 = vmatpush1.bf16.msra.mxu0 0
    %367 = vmatprep.subr.bf16.mxu0 0
    %368 = vmatpush1.bf16.msra.mxu0 0
    %369 = vmatprep.subr.bf16.mxu0 0
    %370 = vmatpush1.bf16.msra.mxu0 %v353
    %371 = vmatprep.subr.bf16.mxu0 0
    %372 = vmatpush2.bf16.msra.mxu0 0
    %373 = vmatprep.subr.bf16.mxu0 0
    %374 = vmatpush2.bf16.msra.mxu0 0
    %375 = vmatprep.subr.bf16.mxu0 0
    %376 = vmatpush2.bf16.msra.mxu0 0
    %377 = vmatprep.subr.bf16.mxu0 0
    %378 = vmatpush2.bf16.msra.mxu0 0
    %379 = vmatprep.subr.bf16.mxu0 0
    %380 = vmatpush2.bf16.msra.mxu0 0
    %381 = vmatprep.subr.bf16.mxu0 0
    %382 = vmatpush2.bf16.msra.mxu0 0
    %383 = vmatprep.subr.bf16.mxu0 0
    %384 = vmatpush2.bf16.msra.mxu0 0
    %385 = vmatprep.subr.bf16.mxu0 0
    %386 = vmatpush2.bf16.msra.mxu0 0
    %387 = vmatprep.mubr.bf16.mxu0 0
    %388 = vmatmul.mubr.bf16.gmra.mxu0 %v28
    %v389 = vpop.f32.mrf.mxu0
    %v390 = vadd.f32 0.0, %v389
    %v391 = vpop.f32.mrf.mxu0
    %v392 = vpop.f32.mrf.mxu0
    %v393 = vpop.f32.mrf.mxu0
    %394 = vdwg.mxu0
    %v395 = vmax.f32 %v349, %v390
    %v397 = vsel %vm26, %v23, 0
    %v400 = vsel %vm30, %v24, 0
    %402 = vmatprep.subr.bf16.mxu0 0
    %403 = vmatpush1.bf16.msra.mxu0 0
    %404 = vmatprep.subr.bf16.mxu0 0
    %405 = vmatpush1.bf16.msra.mxu0 0
    %406 = vmatprep.subr.bf16.mxu0 0
    %407 = vmatpush1.bf16.msra.mxu0 0
    %408 = vmatprep.subr.bf16.mxu0 0
    %409 = vmatpush1.bf16.msra.mxu0 0
    %410 = vmatprep.subr.bf16.mxu0 0
    %411 = vmatpush1.bf16.msra.mxu0 0
    %412 = vmatprep.subr.bf16.mxu0 0
    %413 = vmatpush1.bf16.msra.mxu0 0
    %414 = vmatprep.subr.bf16.mxu0 0
    %415 = vmatpush1.bf16.msra.mxu0 0
    %416 = vmatprep.subr.bf16.mxu0 0
    %417 = vmatpush1.bf16.msra.mxu0 %v400
    %418 = vmatprep.subr.bf16.mxu0 0
    %419 = vmatpush2.bf16.msra.mxu0 0
    %420 = vmatprep.subr.bf16.mxu0 0
    %421 = vmatpush2.bf16.msra.mxu0 0
    %422 = vmatprep.subr.bf16.mxu0 0
    %423 = vmatpush2.bf16.msra.mxu0 0
    %424 = vmatprep.subr.bf16.mxu0 0
    %425 = vmatpush2.bf16.msra.mxu0 0
    %426 = vmatprep.subr.bf16.mxu0 0
    %427 = vmatpush2.bf16.msra.mxu0 0
    %428 = vmatprep.subr.bf16.mxu0 0
    %429 = vmatpush2.bf16.msra.mxu0 0
    %430 = vmatprep.subr.bf16.mxu0 0
    %431 = vmatpush2.bf16.msra.mxu0 0
    %432 = vmatprep.subr.bf16.mxu0 0
    %433 = vmatpush2.bf16.msra.mxu0 0
    %434 = vmatprep.mubr.bf16.mxu0 0
    %435 = vmatmul.mubr.bf16.gmra.mxu0 %v397
    %v436 = vpop.f32.mrf.mxu0
    %v437 = vadd.f32 %v395, %v436
    %v438 = vpop.f32.mrf.mxu0
    %v439 = vpop.f32.mrf.mxu0
    %v440 = vpop.f32.mrf.mxu0
    %441 = vdwg.mxu0
    %v442 = vld [vmem:[%s4] sm:$0xff]
    %444 = vset.pattern.permute.xlu0 0
    %445 = vperm.xlu0 %444, %v442
    %v446 = vpop.permute.xlu0 %445
    %v448 = vadd.f32 %v437, %v446
    %v449 = vmax.f32 %v448, 0.0
    %450 = vst [vmem:[#allocation2] sm:$0xff] %v449
    // Predicated region
    $region22: #{tpu_custom_call.1} parent=1 // pred_check
      _
    $region23: #{tpu_custom_call.1} parent=1 // pred_check_branch
      %452 = sbr.rel (0) target = $region25
    $region24: #{tpu_custom_call.1} parent=1 // pred_region
      %s454 = ssub.s32 128, 128
      %455 = vsyncadd [#allocation3], %s454
      %s457 = sshll.u32 [#allocation2], 4
      %s458 = int_to_ptr.vmem [resolvable:$true] %s457
      %460 = dma.vmem_to_hbm [thread:$0]  %s458, 128, %s5, [#allocation3]
    $region25: #{tpu_custom_call.1} parent=1 // pred_fallthru
      _
    // Predicated region
    $region26: #{tpu_custom_call.1} parent=1 // pred_check
      _
    $region27: #{tpu_custom_call.1} parent=1 // pred_check_branch
      %462 = sbr.rel (0) target = $region29
    $region28: #{tpu_custom_call.1} parent=1 // pred_region
      %463 = dma.done [#allocation3], 128
    $region29: #{tpu_custom_call.1} parent=1 // pred_fallthru
      _
    %464 = vsyncpa [#allocation3], 1

</llo_original>
